<compile_context>
chip_gen: v7x
topology: tpu7x:2x2x1
jax: 0.10.0
libtpu: 0.0.40
codegen_flags: <defaults>
</compile_context>

<pallas_src>
import jax
import jax.numpy as jnp
from jax.experimental import pallas as pl
from jax.experimental.pallas import tpu as pltpu


def _bahdanau_kernel(x_ref, hproj_ref, bias_ref, w_enc_ref, v_ref, o_ref):
    # x_ref:     (S, TB, 2E)  encoder outputs, native seq-major layout
    # hproj_ref: (TB, D)      enc_hidden @ W_hid^T + b  (hoisted out of the kernel)
    # bias_ref:  (TB, S)      additive mask bias (0.0 or -1e9)
    # w_enc_ref: (2E, D)      enc_output part of the attn weight (transposed)
    # v_ref:     (1, D)       v weight (nn.Linear(dec_hid, 1), row form)
    # o_ref:     (TB, S)      softmax attention weights
    S, TB, E2 = x_ref.shape
    D = w_enc_ref.shape[1]

    # Single merged MXU matmul for the whole (TB, S) tile.  TB % 8 == 0 makes this
    # reshape a tile-aligned collapse of the two major dims (no data movement).
    x2d = x_ref[...].reshape(S * TB, E2)
    proj = jnp.dot(x2d, w_enc_ref[...], preferred_element_type=jnp.float32)  # (S*TB, D)

    energy = jnp.tanh(proj.reshape(S, TB, D) + hproj_ref[...][None, :, :])   # (S, TB, D)

    # Contract D with v (VPU mul + lane reduce), then flip the small (S, TB) score
    # tile to (TB, S) so the softmax reduction and the output store are lane-dense.
    scores = jnp.sum(energy * v_ref[...][None, :, :], axis=2)                # (S, TB)
    scores = jnp.transpose(scores) + bias_ref[...]                           # (TB, S)

    smax = jnp.max(scores, axis=1, keepdims=True)
    e = jnp.exp(scores - smax)
    denom = jnp.sum(e, axis=1, keepdims=True)
    o_ref[...] = e * pl.reciprocal(denom, approx=True)


def _pick_batch_block(B, S, E2, target_bytes):
    """Pad batch to a multiple of 8; pick TB (multiple of 8, divides padded batch)
    so one enc_output block stays under ~target_bytes (keeps double-buffered VMEM
    comfortably inside the scoped limit on v5e/v6e/v7x)."""
    Bp = ((B + 7) // 8) * 8
    row_bytes = S * E2 * 4  # one batch row of the x block, f32
    best = 8
    for cand in range(8, Bp + 1, 8):
        if Bp % cand == 0 and cand * row_bytes <= target_bytes:
            best = max(best, cand)
    return Bp, best


def bahdanau_attention(enc_output, enc_hidden, mask, w_attn, b_attn, v_w,
                       *, target_block_bytes=4 << 20):
    """enc_output: [S, B, 2E], enc_hidden: [B, D], mask: [B, S] int.
    w_attn: [D, 2E+D] (torch Linear weight layout), b_attn: [D], v_w: [1, D].
    Returns softmax attention weights [B, S]."""
    S, B, E2 = enc_output.shape
    D = enc_hidden.shape[1]

    # NOTE: no transpose of the big tensor -- the kernel reads [S, B, 2E] in place.
    x = enc_output.astype(jnp.float32)
    # If the encoder emits bf16, x / w_enc can be fed as bf16 (keep f32 accumulation)
    # to halve HBM traffic; kept f32 here to match the f32 reference bit-for-bit-ish.

    w_t = w_attn.T.astype(jnp.float32)         # [2E+D, D]
    w_hid = w_t[:D, :]                         # [D, D]   (hidden part of the concat)
    w_enc = w_t[D:, :]                         # [2E, D]  (enc_output part of the concat)

    # Hoisted decoder-hidden projection: one small, well-shaped XLA GEMM per batch.
    hid_proj = enc_hidden.astype(jnp.float32) @ w_hid + b_attn.astype(jnp.float32)[None, :]  # [B, D]

    # Additive mask bias (replaces the in-kernel int compare + select).
    mask_bias = jnp.where(mask == 0, jnp.float32(-1000000000.0), jnp.float32(0.0))           # [B, S]

    v2 = v_w.astype(jnp.float32).reshape(1, D)

    Bp, TB = _pick_batch_block(B, S, E2, target_block_bytes)
    if Bp != B:
        # Only hit when B is not a multiple of 8 (real batches usually are); the
        # padded rows are dropped after the kernel.
        pad = Bp - B
        x = jnp.pad(x, ((0, 0), (0, pad), (0, 0)))
        hid_proj = jnp.pad(hid_proj, ((0, pad), (0, 0)))
        mask_bias = jnp.pad(mask_bias, ((0, pad), (0, 0)))

    # TODO(synk): very large S*E2 (single block > VMEM budget) would need seq blocking
    # with an online softmax; not needed for typical Bahdanau-attention dims.
    out = pl.pallas_call(
        _bahdanau_kernel,
        out_shape=jax.ShapeDtypeStruct((Bp, S), jnp.float32),
        grid=(Bp // TB,),
        in_specs=[
            pl.BlockSpec((S, TB, E2), lambda b: (0, b, 0)),  # strided read from [S, B, 2E]
            pl.BlockSpec((TB, D), lambda b: (b, 0)),
            pl.BlockSpec((TB, S), lambda b: (b, 0)),
            pl.BlockSpec((E2, D), lambda b: (0, 0)),
            pl.BlockSpec((1, D), lambda b: (0, 0)),
        ],
        out_specs=pl.BlockSpec((TB, S), lambda b: (b, 0)),
        compiler_params=pltpu.CompilerParams(
            dimension_semantics=("parallel",),               # batch blocks are independent
            vmem_limit_bytes=48 * 1024 * 1024,               # headroom on v6e, safe on v7x/v5e
        ),
    )(x, hid_proj, mask_bias, w_enc, v2)
    return out[:B, :]


def _reference(enc_output, enc_hidden, mask, w_attn, b_attn, v_w):
    """Plain-JAX replica of the PyTorch forward for verification."""
    S = enc_output.shape[0]
    h = jnp.repeat(enc_hidden[:, None, :], S, axis=1)          # [B, S, D]
    x = jnp.transpose(enc_output, (1, 0, 2))                   # [B, S, 2E]
    cat = jnp.concatenate((h, x), axis=2)                      # [B, S, 2E+D]
    energy = jnp.tanh(cat @ w_attn.T + b_attn)                 # [B, S, D]
    att = (energy @ v_w.T)[..., 0]                             # [B, S]
    att = jnp.where(mask == 0, -1000000000.0, att)
    return jax.nn.softmax(att, axis=1)


if __name__ == "__main__":
    # small, deterministic config
    enc_hid_dim = 16
    dec_hid_dim = 32
    seq_len = 8
    batch = 2
    E2 = enc_hid_dim * 2

    key = jax.random.PRNGKey(0)
    k1, k2, k3, k4, k5 = jax.random.split(key, 5)

    # parameters (torch nn.Linear shapes), deterministic init
    w_attn = 0.1 * jax.random.normal(k1, (dec_hid_dim, E2 + dec_hid_dim), jnp.float32)
    b_attn = 0.1 * jax.random.normal(k2, (dec_hid_dim,), jnp.float32)
    v_w = 0.1 * jax.random.normal(k3, (1, dec_hid_dim), jnp.float32)

    # inputs
    enc_output = jax.random.normal(k4, (seq_len, batch, E2), jnp.float32)   # [S, B, 2E]
    enc_hidden = jax.random.normal(k5, (batch, dec_hid_dim), jnp.float32)   # [B, D]
    # mask: batch 0 sees full sequence, batch 1 has the last 3 positions padded
    mask = jnp.array(
        [[1] * seq_len,
         [1] * (seq_len - 3) + [0] * 3],
        dtype=jnp.int32,
    )                                                                        # [B, S]

    out = bahdanau_attention(enc_output, enc_hidden, mask, w_attn, b_attn, v_w)
    out = jax.block_until_ready(out)

    ref = _reference(enc_output, enc_hidden, mask, w_attn, b_attn, v_w)
    assert out.shape == (batch, seq_len)
    # tolerance loosened slightly for the approx-reciprocal softmax denominator
    assert jnp.allclose(out, ref, atol=2e-3, rtol=2e-3), (out, ref)
    assert jnp.allclose(jnp.sum(out, axis=1), 1.0, atol=2e-3)

    print("KERNEL_OK")
</pallas_src>

<mosaic_0001>
module attributes {stable_mosaic.version = 11 : i64} {
  func.func @_bahdanau_kernel(%arg0: i32, %arg1: memref<8x8x32xf32, #tpu.memory_space<vmem>>, %arg2: memref<8x32xf32, #tpu.memory_space<vmem>>, %arg3: memref<8x8xf32, #tpu.memory_space<vmem>>, %arg4: memref<32x32xf32, #tpu.memory_space<vmem>>, %arg5: memref<1x32xf32, #tpu.memory_space<vmem>>, %arg6: memref<8x8xf32, #tpu.memory_space<vmem>>) attributes {dimension_semantics = [#tpu.dimension_semantics<parallel>], iteration_bounds = array<i64: 1>, scalar_prefetch = 0 : i64, scratch_operands = 0 : i64, tpu.core_type = #tpu.core_type<tc>, window_params = [{transform_indices = @transform_0, window_bounds = array<i64: 8, 8, 32>}, {transform_indices = @transform_1, window_bounds = array<i64: 8, 32>}, {transform_indices = @transform_2, window_bounds = array<i64: 8, 8>}, {pipeline_mode = #tpu.pipeline_mode<synchronous>, transform_indices = @transform_3, window_bounds = array<i64: 32, 32>}, {pipeline_mode = #tpu.pipeline_mode<synchronous>, transform_indices = @transform_4, window_bounds = array<i64: 1, 32>}, {transform_indices = @transform_5, window_bounds = array<i64: 8, 8>}]} {
    %c0 = arith.constant 0 : index
    %c0_0 = arith.constant 0 : index
    %c0_1 = arith.constant 0 : index
    %0 = vector.load %arg1[%c0, %c0_0, %c0_1] : memref<8x8x32xf32, #tpu.memory_space<vmem>>, vector<8x8x32xf32>
    %1 = vector.shape_cast %0 : vector<8x8x32xf32> to vector<64x32xf32>
    %c0_2 = arith.constant 0 : index
    %c0_3 = arith.constant 0 : index
    %2 = vector.load %arg4[%c0_2, %c0_3] : memref<32x32xf32, #tpu.memory_space<vmem>>, vector<32x32xf32>
    %cst = arith.constant dense<0.000000e+00> : vector<64x32xf32>
    %3 = tpu.matmul %1, %2, %cst {dimension_numbers = #tpu.dot_dimension_numbers<[1], [0], [0], [1], [0, 0, 1, 1], [], []>} : vector<64x32xf32>, vector<32x32xf32>, vector<64x32xf32> -> vector<64x32xf32>
    %4 = vector.shape_cast %3 : vector<64x32xf32> to vector<8x8x32xf32>
    %c0_4 = arith.constant 0 : index
    %c0_5 = arith.constant 0 : index
    %5 = vector.load %arg2[%c0_4, %c0_5] : memref<8x32xf32, #tpu.memory_space<vmem>>, vector<8x32xf32>
    %6 = vector.shape_cast %5 : vector<8x32xf32> to vector<1x8x32xf32>
    %7 = vector.broadcast %6 : vector<1x8x32xf32> to vector<8x8x32xf32>
    %8 = arith.addf %4, %7 : vector<8x8x32xf32>
    %9 = math.tanh %8 : vector<8x8x32xf32>
    %c0_6 = arith.constant 0 : index
    %c0_7 = arith.constant 0 : index
    %10 = vector.load %arg5[%c0_6, %c0_7] : memref<1x32xf32, #tpu.memory_space<vmem>>, vector<1x32xf32>
    %11 = vector.shape_cast %10 : vector<1x32xf32> to vector<1x1x32xf32>
    %12 = vector.broadcast %11 : vector<1x1x32xf32> to vector<8x8x32xf32>
    %13 = arith.mulf %9, %12 : vector<8x8x32xf32>
    %cst_8 = arith.constant dense<0.000000e+00> : vector<8x8xf32>
    %14 = vector.multi_reduction <add>, %13, %cst_8 [2] : vector<8x8x32xf32> to vector<8x8xf32>
    %15 = tpu.transpose %14, [1, 0] : vector<8x8xf32> -> vector<8x8xf32>
    %c0_9 = arith.constant 0 : index
    %c0_10 = arith.constant 0 : index
    %16 = vector.load %arg3[%c0_9, %c0_10] : memref<8x8xf32, #tpu.memory_space<vmem>>, vector<8x8xf32>
    %17 = arith.addf %15, %16 : vector<8x8xf32>
    %cst_11 = arith.constant dense<0xFF800000> : vector<8xf32>
    %18 = vector.multi_reduction <maximumf>, %17, %cst_11 [1] : vector<8x8xf32> to vector<8xf32>
    %19 = vector.shape_cast %18 : vector<8xf32> to vector<8x1xf32>
    %20 = vector.broadcast %19 : vector<8x1xf32> to vector<8x8xf32>
    %21 = arith.subf %17, %20 : vector<8x8xf32>
    %22 = math.exp %21 : vector<8x8xf32>
    %cst_12 = arith.constant dense<0.000000e+00> : vector<8xf32>
    %23 = vector.multi_reduction <add>, %22, %cst_12 [1] : vector<8x8xf32> to vector<8xf32>
    %24 = vector.shape_cast %23 : vector<8xf32> to vector<8x1xf32>
    %25 = tpu.reciprocal %24 {approx = true} : vector<8x1xf32> -> vector<8x1xf32>
    %26 = vector.broadcast %25 : vector<8x1xf32> to vector<8x8xf32>
    %27 = arith.mulf %22, %26 : vector<8x8xf32>
    %c0_13 = arith.constant 0 : index
    %c0_14 = arith.constant 0 : index
    %28 = vector.load %arg6[%c0_13, %c0_14] : memref<8x8xf32, #tpu.memory_space<vmem>>, vector<8x8xf32>
    tpu.vector_store %arg6[%c0_13, %c0_14], %27 {strides = array<i32>} : memref<8x8xf32, #tpu.memory_space<vmem>>, vector<8x8xf32>,
    return
  }
  func.func @transform_0(%arg0: i32) -> (i32, i32, i32) {
    %c0_i32 = arith.constant 0 : i32
    %c0_i32_0 = arith.constant 0 : i32
    %c0_i32_1 = arith.constant 0 : i32
    return %c0_i32, %arg0, %c0_i32_0 : i32, i32, i32
  }
  func.func @transform_1(%arg0: i32) -> (i32, i32) {
    %c0_i32 = arith.constant 0 : i32
    %c0_i32_0 = arith.constant 0 : i32
    return %arg0, %c0_i32 : i32, i32
  }
  func.func @transform_2(%arg0: i32) -> (i32, i32) {
    %c0_i32 = arith.constant 0 : i32
    %c0_i32_0 = arith.constant 0 : i32
    return %arg0, %c0_i32 : i32, i32
  }
  func.func @transform_3(%arg0: i32) -> (i32, i32) {
    %c0_i32 = arith.constant 0 : i32
    %c0_i32_0 = arith.constant 0 : i32
    %c0_i32_1 = arith.constant 0 : i32
    return %c0_i32, %c0_i32_0 : i32, i32
  }
  func.func @transform_4(%arg0: i32) -> (i32, i32) {
    %c0_i32 = arith.constant 0 : i32
    %c0_i32_0 = arith.constant 0 : i32
    %c0_i32_1 = arith.constant 0 : i32
    return %c0_i32, %c0_i32_0 : i32, i32
  }
  func.func @transform_5(%arg0: i32) -> (i32, i32) {
    %c0_i32 = arith.constant 0 : i32
    %c0_i32_0 = arith.constant 0 : i32
    return %arg0, %c0_i32 : i32, i32
  }
}

</mosaic_0001>

<llo_original>
// kernel: tpu_custom_call.1
$region0: #{tpu_custom_call.1}
  #allocation0 [shape = 'u32[]', space=smem, size = 0x4, offset = 0x4, fixed_abs, tag = 'smem constant byte address 0x4 - core index']
  #allocation1 [shape = 'u32[144,128]{1,0:T(1,128)}', space=vmem, size = 0x12000, scoped, tag = 'internal scratch']
  %s0 = inlined_call_operand.hbm [shape: f32[8,8,32], index: 0, kind: input, shape index: {}]
  %s1 = inlined_call_operand.hbm [shape: f32[8,32], index: 1, kind: input, shape index: {}]
  %s2 = inlined_call_operand.hbm [shape: f32[8,8], index: 2, kind: input, shape index: {}]
  %s3 = inlined_call_operand.hbm [shape: f32[32,32], index: 3, kind: input, shape index: {}]
  %s4 = inlined_call_operand.vmem [shape: f32[1,32], index: 4, kind: input, shape index: {}]
  %s5 = inlined_call_operand.hbm [shape: f32[8,8], index: 5, kind: output, shape index: {}]
  %s6 = sld [smem:[#allocation0]]
  $region46: #{tpu_custom_call.1} parent=0
    _
  %s8 = ssub.s32 1, %s6
  %s9 = scalar_select 0, %s8, %s6
  $region1: #{tpu_custom_call.1} parent=0
    #allocation2 [shape = 'u8[32768]{0}', space=vmem, size = 0x8000, scoped, tag = 'input window, operand 0, single buffered']
    #allocation3 [shape = 's32[1]{0}', space=sflag, size = 0x4, scoped, tag = 'scoped memory for tpu_custom_call.1']
    #allocation4 [shape = 's32[1]{0}', space=sflag, size = 0x4, scoped, tag = 'scoped memory for tpu_custom_call.1']
    #allocation5 [shape = 'u8[4096]{0}', space=vmem, size = 0x1000, scoped, tag = 'input window, operand 1, single buffered']
    #allocation6 [shape = 's32[1]{0}', space=sflag, size = 0x4, scoped, tag = 'scoped memory for tpu_custom_call.1']
    #allocation7 [shape = 'u8[4096]{0}', space=vmem, size = 0x1000, scoped, tag = 'input window, operand 2, single buffered']
    #allocation8 [shape = 'u8[16384]{0}', space=vmem, size = 0x4000, scoped, tag = 'input window, operand 3, single buffered']
    #allocation9 [shape = 's32[1]{0}', space=sflag, size = 0x4, scoped, tag = 'scoped memory for tpu_custom_call.1']
    #allocation10 [shape = 'u8[4096]{0}', space=vmem, size = 0x1000, scoped, tag = 'output window, operand 0, single buffered']
    %10 = vsyncpa [#allocation3], 0
    %11 = vsyncpa [#allocation6], 0
    %12 = vsyncpa [#allocation9], 0
    %13 = vsyncpa [#allocation4], 0
    // Predicated region
    $region2: #{tpu_custom_call.1} parent=1 // pred_check
      _
    $region3: #{tpu_custom_call.1} parent=1 // pred_check_branch
      %15 = sbr.rel (0) target = $region5
    $region4: #{tpu_custom_call.1} parent=1 // pred_region
      %s17 = ssub.s32 1024, 1024
      %18 = vsyncadd [#allocation3], %s17
      %s19 = sshll.u32 [#allocation2], 4
      %s20 = int_to_ptr.vmem [resolvable:$true] %s19
      %25 = dma.hbm_to_vmem [thread:$0]  %s0, 1024, %s20, [#allocation3], 128, 128, 8
    $region5: #{tpu_custom_call.1} parent=1 // pred_fallthru
      _
    // Predicated region
    $region6: #{tpu_custom_call.1} parent=1 // pred_check
      _
    $region7: #{tpu_custom_call.1} parent=1 // pred_check_branch
      %27 = sbr.rel (0) target = $region9
    $region8: #{tpu_custom_call.1} parent=1 // pred_region
      %s29 = ssub.s32 128, 128
      %30 = vsyncadd [#allocation6], %s29
      %s32 = sshll.u32 [#allocation5], 4
      %s33 = int_to_ptr.vmem [resolvable:$true] %s32
      %35 = dma.hbm_to_vmem [thread:$0]  %s1, 128, %s33, [#allocation6]
    $region9: #{tpu_custom_call.1} parent=1 // pred_fallthru
      _
    // Predicated region
    $region10: #{tpu_custom_call.1} parent=1 // pred_check
      _
    $region11: #{tpu_custom_call.1} parent=1 // pred_check_branch
      %37 = sbr.rel (0) target = $region13
    $region12: #{tpu_custom_call.1} parent=1 // pred_region
      %s39 = ssub.s32 128, 128
      %40 = vsyncadd [#allocation6], %s39
      %s42 = sshll.u32 [#allocation7], 4
      %s43 = int_to_ptr.vmem [resolvable:$true] %s42
      %45 = dma.hbm_to_vmem [thread:$0]  %s2, 128, %s43, [#allocation6]
    $region13: #{tpu_custom_call.1} parent=1 // pred_fallthru
      _
    // Predicated region
    $region14: #{tpu_custom_call.1} parent=1 // pred_check
      _
    $region15: #{tpu_custom_call.1} parent=1 // pred_check_branch
      %47 = sbr.rel (0) target = $region17
    $region16: #{tpu_custom_call.1} parent=1 // pred_region
      %s49 = ssub.s32 512, 512
      %50 = vsyncadd [#allocation9], %s49
      %s51 = sshll.u32 [#allocation8], 4
      %s52 = int_to_ptr.vmem [resolvable:$true] %s51
      %57 = dma.hbm_to_vmem [thread:$0]  %s3, 512, %s52, [#allocation9], 128, 128, 8
    $region17: #{tpu_custom_call.1} parent=1 // pred_fallthru
      _
    // Predicated region
    $region18: #{tpu_custom_call.1} parent=1 // pred_check
      _
    $region19: #{tpu_custom_call.1} parent=1 // pred_check_branch
      %59 = sbr.rel (0) target = $region21
    $region20: #{tpu_custom_call.1} parent=1 // pred_region
      _
    $region21: #{tpu_custom_call.1} parent=1 // pred_fallthru
      _
    // Predicated region
    $region22: #{tpu_custom_call.1} parent=1 // pred_check
      _
    $region23: #{tpu_custom_call.1} parent=1 // pred_check_branch
      %61 = sbr.rel (0) target = $region25
    $region24: #{tpu_custom_call.1} parent=1 // pred_region
      %62 = dma.done [#allocation3], 1024
    $region25: #{tpu_custom_call.1} parent=1 // pred_fallthru
      _
    // Predicated region
    $region26: #{tpu_custom_call.1} parent=1 // pred_check
      _
    $region27: #{tpu_custom_call.1} parent=1 // pred_check_branch
      %64 = sbr.rel (0) target = $region29
    $region28: #{tpu_custom_call.1} parent=1 // pred_region
      %65 = dma.done [#allocation6], 128
    $region29: #{tpu_custom_call.1} parent=1 // pred_fallthru
      _
    // Predicated region
    $region30: #{tpu_custom_call.1} parent=1 // pred_check
      _
    $region31: #{tpu_custom_call.1} parent=1 // pred_check_branch
      %67 = sbr.rel (0) target = $region33
    $region32: #{tpu_custom_call.1} parent=1 // pred_region
      %68 = dma.done [#allocation6], 128
    $region33: #{tpu_custom_call.1} parent=1 // pred_fallthru
      _
    // Predicated region
    $region34: #{tpu_custom_call.1} parent=1 // pred_check
      _
    $region35: #{tpu_custom_call.1} parent=1 // pred_check_branch
      %70 = sbr.rel (0) target = $region37
    $region36: #{tpu_custom_call.1} parent=1 // pred_region
      %71 = dma.done [#allocation9], 512
    $region37: #{tpu_custom_call.1} parent=1 // pred_fallthru
      _
    %v72 = vld [vmem:[#allocation2] sm:$0xff]
    %v73 = vld [vmem:[#allocation2 + $0x8] sm:$0xff]
    %v74 = vld [vmem:[#allocation2 + $0x10] sm:$0xff]
    %v75 = vld [vmem:[#allocation2 + $0x18] sm:$0xff]
    %v76 = vld [vmem:[#allocation2 + $0x20] sm:$0xff]
    %v77 = vld [vmem:[#allocation2 + $0x28] sm:$0xff]
    %v78 = vld [vmem:[#allocation2 + $0x30] sm:$0xff]
    %v79 = vld [vmem:[#allocation2 + $0x38] sm:$0xff]
    %v80 = vld [vmem:[#allocation8] sm:$0xff]
    %v81 = vld [vmem:[#allocation8 + $0x8] sm:$0xff]
    %v82 = vld [vmem:[#allocation8 + $0x10] sm:$0xff]
    %v83 = vld [vmem:[#allocation8 + $0x18] sm:$0xff]
    %vm84 = vcmask 261120
    %v86 = vsel %vm84, %v72, 0
    %v89 = vsel %vm84, %v73, 0
    %v92 = vsel %vm84, %v74, 0
    %v95 = vsel %vm84, %v75, 0
    %v98 = vsel %vm84, %v76, 0
    %v101 = vsel %vm84, %v77, 0
    %v104 = vsel %vm84, %v78, 0
    %v107 = vsel %vm84, %v79, 0
    %109 = vmatprep.subr.mxu0 0.0
    %110 = vmatpush1.msra.mxu0 %v80
    %111 = vmatprep.subr.mxu0 0.0
    %112 = vmatpush1.msra.mxu0 %v81
    %113 = vmatprep.subr.mxu0 0.0
    %114 = vmatpush1.msra.mxu0 %v82
    %115 = vmatprep.subr.mxu0 0.0
    %116 = vmatpush1.msra.mxu0 %v83
    %117 = vmatprep.subr.mxu0 0.0
    %118 = vmatpush1.msra.mxu0 0.0
    %119 = vmatprep.subr.mxu0 0.0
    %120 = vmatpush1.msra.mxu0 0.0
    %121 = vmatprep.subr.mxu0 0.0
    %122 = vmatpush1.msra.mxu0 0.0
    %123 = vmatprep.subr.mxu0 0.0
    %124 = vmatpush1.msra.mxu0 0.0
    %125 = vmatprep.subr.mxu0 0.0
    %126 = vmatpush1.msra.mxu0 0.0
    %127 = vmatprep.subr.mxu0 0.0
    %128 = vmatpush1.msra.mxu0 0.0
    %129 = vmatprep.subr.mxu0 0.0
    %130 = vmatpush1.msra.mxu0 0.0
    %131 = vmatprep.subr.mxu0 0.0
    %132 = vmatpush1.msra.mxu0 0.0
    %133 = vmatprep.subr.mxu0 0.0
    %134 = vmatpush1.msra.mxu0 0.0
    %135 = vmatprep.subr.mxu0 0.0
    %136 = vmatpush1.msra.mxu0 0.0
    %137 = vmatprep.subr.mxu0 0.0
    %138 = vmatpush1.msra.mxu0 0.0
    %139 = vmatprep.subr.mxu0 0.0
    %140 = vmatpush1.msra.mxu0 0.0
    %141 = vmatprep.subr.mxu0 0.0
    %142 = vmatpush1.msra.mxu0 0.0
    %143 = vmatprep.subr.mxu0 0.0
    %144 = vmatpush1.msra.mxu0 0.0
    %145 = vmatprep.subr.mxu0 0.0
    %146 = vmatpush1.msra.mxu0 0.0
    %147 = vmatprep.subr.mxu0 0.0
    %148 = vmatpush1.msra.mxu0 0.0
    %149 = vmatprep.subr.mxu0 0.0
    %150 = vmatpush1.msra.mxu0 0.0
    %151 = vmatprep.subr.mxu0 0.0
    %152 = vmatpush1.msra.mxu0 0.0
    %153 = vmatprep.subr.mxu0 0.0
    %154 = vmatpush1.msra.mxu0 0.0
    %155 = vmatprep.subr.mxu0 0.0
    %156 = vmatpush1.msra.mxu0 0.0
    %157 = vmatprep.subr.mxu0 0.0
    %158 = vmatpush1.msra.mxu0 0.0
    %159 = vmatprep.subr.mxu0 0.0
    %160 = vmatpush1.msra.mxu0 0.0
    %161 = vmatprep.subr.mxu0 0.0
    %162 = vmatpush1.msra.mxu0 0.0
    %163 = vmatprep.subr.mxu0 0.0
    %164 = vmatpush1.msra.mxu0 0.0
    %165 = vmatprep.subr.mxu0 0.0
    %166 = vmatpush1.msra.mxu0 0.0
    %167 = vmatprep.subr.mxu0 0.0
    %168 = vmatpush1.msra.mxu0 0.0
    %169 = vmatprep.subr.mxu0 0.0
    %170 = vmatpush1.msra.mxu0 0.0
    %171 = vmatprep.subr.mxu0 0.0
    %172 = vmatpush1.msra.mxu0 0.0
    %173 = vmatprep.mubr.f32.mxu0 0.0
    %174 = vmatmul.mubr.f32.gmra.mrb[0].mxu0 %v86
    %v175 = vpop.f32.mrb[0].mxu0
    %v176 = vadd.f32 0.0, %v175
    %v177 = vpop.f32.mrb[0].mxu0
    %178 = vmatprep.mubr.f32.mxu0 0.0
    %179 = vmatmul.mubr.f32.gmra.mrb[0].mxu0 %v89
    %v180 = vpop.f32.mrb[0].mxu0
    %v181 = vadd.f32 0.0, %v180
    %v182 = vpop.f32.mrb[0].mxu0
    %183 = vmatprep.mubr.f32.mxu0 0.0
    %184 = vmatmul.mubr.f32.gmra.mrb[0].mxu0 %v92
    %v185 = vpop.f32.mrb[0].mxu0
    %v186 = vadd.f32 0.0, %v185
    %v187 = vpop.f32.mrb[0].mxu0
    %188 = vmatprep.mubr.f32.mxu0 0.0
    %189 = vmatmul.mubr.f32.gmra.mrb[0].mxu0 %v95
    %v190 = vpop.f32.mrb[0].mxu0
    %v191 = vadd.f32 0.0, %v190
    %v192 = vpop.f32.mrb[0].mxu0
    %193 = vmatprep.mubr.f32.mxu0 0.0
    %194 = vmatmul.mubr.f32.gmra.mrb[0].mxu0 %v98
    %v195 = vpop.f32.mrb[0].mxu0
    %v196 = vadd.f32 0.0, %v195
    %v197 = vpop.f32.mrb[0].mxu0
    %198 = vmatprep.mubr.f32.mxu0 0.0
    %199 = vmatmul.mubr.f32.gmra.mrb[0].mxu0 %v101
    %v200 = vpop.f32.mrb[0].mxu0
    %v201 = vadd.f32 0.0, %v200
    %v202 = vpop.f32.mrb[0].mxu0
    %203 = vmatprep.mubr.f32.mxu0 0.0
    %204 = vmatmul.mubr.f32.gmra.mrb[0].mxu0 %v104
    %v205 = vpop.f32.mrb[0].mxu0
    %v206 = vadd.f32 0.0, %v205
    %v207 = vpop.f32.mrb[0].mxu0
    %208 = vmatprep.mubr.f32.mxu0 0.0
    %209 = vmatmul.mubr.f32.gmra.mrb[0].mxu0 %v107
    %v210 = vpop.f32.mrb[0].mxu0
    %v211 = vadd.f32 0.0, %v210
    %v212 = vpop.f32.mrb[0].mxu0
    %213 = vdwg.mxu0
    %v214 = vld [vmem:[#allocation5] sm:$0xff]
    %v215 = vadd.f32 %v176, %v214
    %v216 = vadd.f32 %v181, %v214
    %v217 = vadd.f32 %v186, %v214
    %v218 = vadd.f32 %v191, %v214
    %v219 = vadd.f32 %v196, %v214
    %v220 = vadd.f32 %v201, %v214
    %v221 = vadd.f32 %v206, %v214
    %v222 = vadd.f32 %v211, %v214
    %v223 = vtanh.pop %v215
    %v224 = vtanh.pop %v216
    %v225 = vtanh.pop %v217
    %v226 = vtanh.pop %v218
    %v227 = vtanh.pop %v219
    %v228 = vtanh.pop %v220
    %v229 = vtanh.pop %v221
    %v230 = vtanh.pop %v222
    %v231 = vld [vmem:[%s4] sm:$0x1]
    %v233 = vlaneseq
    %v234 = vshrl.u32 %v233, 7
    %v235 = vsub.s32 0, %v234
    %v236 = vrot.slane %v231, %v235
    %v238 = vmul.f32 %v223, %v236
    %v239 = vmul.f32 %v224, %v236
    %v240 = vmul.f32 %v225, %v236
    %v241 = vmul.f32 %v226, %v236
    %v242 = vmul.f32 %v227, %v236
    %v243 = vmul.f32 %v228, %v236
    %v244 = vmul.f32 %v229, %v236
    %v245 = vmul.f32 %v230, %v236
    %v246 = vsel %vm84, %v238, 0.0
    %247 = vadd.xlane.f32.xlu0 %v246
    %v248 = vpop.xlane.xlu0 %247
    %v249 = vsel %vm84, %v239, 0.0
    %250 = vadd.xlane.f32.xlu0 %v249
    %v251 = vpop.xlane.xlu0 %250
    %v252 = vsel %vm84, %v240, 0.0
    %253 = vadd.xlane.f32.xlu0 %v252
    %v254 = vpop.xlane.xlu0 %253
    %v255 = vsel %vm84, %v241, 0.0
    %256 = vadd.xlane.f32.xlu0 %v255
    %v257 = vpop.xlane.xlu0 %256
    %v258 = vsel %vm84, %v242, 0.0
    %259 = vadd.xlane.f32.xlu0 %v258
    %v260 = vpop.xlane.xlu0 %259
    %v261 = vsel %vm84, %v243, 0.0
    %262 = vadd.xlane.f32.xlu0 %v261
    %v263 = vpop.xlane.xlu0 %262
    %v264 = vsel %vm84, %v244, 0.0
    %265 = vadd.xlane.f32.xlu0 %v264
    %v266 = vpop.xlane.xlu0 %265
    %v267 = vsel %vm84, %v245, 0.0
    %268 = vadd.xlane.f32.xlu0 %v267
    %v269 = vpop.xlane.xlu0 %268
    %v278 = vlaneseq
    %v279 = vand.u32 %v278, 127
    %v280 = vlaneseq
    %v281 = vshrl.u32 %v280, 7
    %v282 = vsub.s32 %v279, %v281
    %v283 = vrot.slane %v248, %v282
    %v284 = vlaneseq
    %v285 = vshrl.u32 %v284, 7
    %v286 = vsub.s32 %v279, %v285
    %v287 = vrot.slane %v251, %v286
    %v288 = vlaneseq
    %v289 = vshrl.u32 %v288, 7
    %v290 = vsub.s32 %v279, %v289
    %v291 = vrot.slane %v254, %v290
    %v292 = vlaneseq
    %v293 = vshrl.u32 %v292, 7
    %v294 = vsub.s32 %v279, %v293
    %v295 = vrot.slane %v257, %v294
    %v296 = vlaneseq
    %v297 = vshrl.u32 %v296, 7
    %v298 = vsub.s32 %v279, %v297
    %v299 = vrot.slane %v260, %v298
    %v300 = vlaneseq
    %v301 = vshrl.u32 %v300, 7
    %v302 = vsub.s32 %v279, %v301
    %v303 = vrot.slane %v263, %v302
    %v304 = vlaneseq
    %v305 = vshrl.u32 %v304, 7
    %v306 = vsub.s32 %v279, %v305
    %v307 = vrot.slane %v266, %v306
    %v308 = vlaneseq
    %v309 = vshrl.u32 %v308, 7
    %v310 = vsub.s32 %v279, %v309
    %v311 = vrot.slane %v269, %v310
    %vm312 = vcmask 1041409
    %v313 = vsel %vm312, %v287, %v283
    %vm314 = vcmask 1042434
    %v315 = vsel %vm314, %v291, %v313
    %vm316 = vcmask 1043459
    %v317 = vsel %vm316, %v295, %v315
    %vm318 = vcmask 1044484
    %v319 = vsel %vm318, %v299, %v317
    %vm320 = vcmask 1045509
    %v321 = vsel %vm320, %v303, %v319
    %vm322 = vcmask 1046534
    %v323 = vsel %vm322, %v307, %v321
    %vm324 = vcmask 1047559
    %v325 = vsel %vm324, %v311, %v323
    %327 = vxpose.xlu0.b32.start [1/16] %v325, 128
    %328 = vxpose.xlu0.b32.cont [2/16] 0.0, 128
    %329 = vxpose.xlu0.b32.cont [3/16] 0.0, 128
    %330 = vxpose.xlu0.b32.cont [4/16] 0.0, 128
    %331 = vxpose.xlu0.b32.cont [5/16] 0.0, 128
    %332 = vxpose.xlu0.b32.cont [6/16] 0.0, 128
    %333 = vxpose.xlu0.b32.cont [7/16] 0.0, 128
    %334 = vxpose.xlu0.b32.cont [8/16] 0.0, 128
    %335 = vxpose.xlu0.b32.cont [9/16] 0.0, 128
    %336 = vxpose.xlu0.b32.cont [10/16] 0.0, 128
    %337 = vxpose.xlu0.b32.cont [11/16] 0.0, 128
    %338 = vxpose.xlu0.b32.cont [12/16] 0.0, 128
    %339 = vxpose.xlu0.b32.cont [13/16] 0.0, 128
    %340 = vxpose.xlu0.b32.cont [14/16] 0.0, 128
    %341 = vxpose.xlu0.b32.cont [15/16] 0.0, 128
    %342 = vxpose.xlu0.b32.end [16/16] 0.0, 128
    %v343 = vpop.trf.xlu0
    %v344 = vpop.trf.xlu0
    %v345 = vpop.trf.xlu0
    %v346 = vpop.trf.xlu0
    %v347 = vpop.trf.xlu0
    %v348 = vpop.trf.xlu0
    %v349 = vpop.trf.xlu0
    %v350 = vpop.trf.xlu0
    %v351 = vpop.trf.xlu0
    %v352 = vpop.trf.xlu0
    %v353 = vpop.trf.xlu0
    %v354 = vpop.trf.xlu0
    %v355 = vpop.trf.xlu0
    %v356 = vpop.trf.xlu0
    %v357 = vpop.trf.xlu0
    %v358 = vpop.trf.xlu0
    %v359 = vld [vmem:[#allocation7] sm:$0xff]
    %v360 = vadd.f32 %v343, %v359
    %vm361 = vcmask 64512
    %v362 = vsel %vm361, %v360, -inf
    %363 = vmax.xlane.f32.xlu0 %v362
    %v364 = vpop.xlane.xlu0 %363
    %v365 = vsub.f32 %v360, %v364
    %v366 = vmul.f32 %v365, 1.442695
    %v367 = vpow.pop %v366
    %v368 = vsel %vm361, %v367, 0.0
    %369 = vadd.xlane.f32.xlu0 %v368
    %v370 = vpop.xlane.xlu0 %369
    %v371 = vrcp.pop %v370
    %v372 = vmul.f32 %v367, %v371
    %373 = vst.msk [vmem:[#allocation10] sm:$0xff] %vm361, %v372
    // Predicated region
    $region38: #{tpu_custom_call.1} parent=1 // pred_check
      _
    $region39: #{tpu_custom_call.1} parent=1 // pred_check_branch
      %375 = sbr.rel (0) target = $region41
    $region40: #{tpu_custom_call.1} parent=1 // pred_region
      %s377 = ssub.s32 128, 128
      %378 = vsyncadd [#allocation4], %s377
      %s380 = sshll.u32 [#allocation10], 4
      %s381 = int_to_ptr.vmem [resolvable:$true] %s380
      %383 = dma.vmem_to_hbm [thread:$0]  %s381, 128, %s5, [#allocation4]
    $region41: #{tpu_custom_call.1} parent=1 // pred_fallthru
      _
    // Predicated region
    $region42: #{tpu_custom_call.1} parent=1 // pred_check
      _
    $region43: #{tpu_custom_call.1} parent=1 // pred_check_branch
      %385 = sbr.rel (0) target = $region45
    $region44: #{tpu_custom_call.1} parent=1 // pred_region
      %386 = dma.done [#allocation4], 128
    $region45: #{tpu_custom_call.1} parent=1 // pred_fallthru
      _
    %387 = vsyncpa [#allocation3], 1
    %388 = vsyncpa [#allocation6], 1
    %389 = vsyncpa [#allocation9], 1
    %390 = vsyncpa [#allocation4], 1

</llo_original>
